<compile_context>
chip_gen: v6e
topology: v6e:2x2x1
jax: 0.10.0
libtpu: 0.0.40
codegen_flags: <defaults>
</compile_context>

<pallas_src>
import functools

import jax
import jax.numpy as jnp
from jax import lax
from jax.experimental import pallas as pl
from jax.experimental.pallas import tpu as pltpu


# ---------------------------------------------------------------------------
# Pass 1: shared batch-norm statistics over the combined 2N samples.
# ---------------------------------------------------------------------------
def _stats_kernel(za_ref, zb_ref, mean_ref, istd_ref, *, n_batch, eps):
    k = pl.program_id(1)

    @pl.when(k == 0)
    def _():
        mean_ref[...] = jnp.zeros_like(mean_ref)   # running sum
        istd_ref[...] = jnp.zeros_like(istd_ref)   # running sum of squares

    za = za_ref[...].astype(jnp.float32)
    zb = zb_ref[...].astype(jnp.float32)
    mean_ref[...] += (jnp.sum(za, axis=0, keepdims=True) +
                      jnp.sum(zb, axis=0, keepdims=True))
    istd_ref[...] += (jnp.sum(za * za, axis=0, keepdims=True) +
                      jnp.sum(zb * zb, axis=0, keepdims=True))

    @pl.when(k == pl.num_programs(1) - 1)
    def _():
        inv_2n = jnp.float32(1.0 / (2.0 * n_batch))
        mean = mean_ref[...] * inv_2n
        var = jnp.maximum(istd_ref[...] * inv_2n - mean * mean, 0.0)
        mean_ref[...] = mean
        # Fold the 1/N of c = za_n^T zb_n / N into the scale (1/sqrt(N) per side).
        istd_ref[...] = (lax.rsqrt(var + jnp.float32(eps)) *
                         jnp.float32(1.0 / (n_batch ** 0.5)))


# ---------------------------------------------------------------------------
# Pass 2: pre-normalize (and pre-scale) both views once, cast to bf16.
# ---------------------------------------------------------------------------
def _normalize_kernel(za_ref, zb_ref, mean_ref, istd_ref, oa_ref, ob_ref):
    mean = mean_ref[...]
    istd = istd_ref[...]
    oa_ref[...] = ((za_ref[...].astype(jnp.float32) - mean) * istd).astype(oa_ref.dtype)
    ob_ref[...] = ((zb_ref[...].astype(jnp.float32) - mean) * istd).astype(ob_ref.dtype)


# ---------------------------------------------------------------------------
# Pass 3: tiled cross-correlation + loss reduction (c never hits HBM).
# ---------------------------------------------------------------------------
def _corr_kernel(za_ref, zb_ref, out_ref, c_acc, *, lambda_param):
    i = pl.program_id(0)
    j = pl.program_id(1)
    k = pl.program_id(2)

    @pl.when((j == 0) & (k == 0))
    def _():
        out_ref[0, 0] = jnp.float32(0.0)

    @pl.when(k == 0)
    def _():
        c_acc[...] = jnp.zeros_like(c_acc)

    # MXU: operands are already normalized, carry the folded 1/sqrt(N) scale,
    # and are bf16 (or f32) — accumulate this (TD, TD) tile of c in f32.
    # Keep the `+= dot(...)` form with k innermost (v7x MRB accumulation).
    c_acc[...] += lax.dot_general(
        za_ref[...], zb_ref[...],
        dimension_numbers=(((0,), (0,)), ((), ())),
        preferred_element_type=jnp.float32)

    @pl.when(k == pl.num_programs(2) - 1)
    def _():
        c = c_acc[...]
        frob = jnp.sum(c * c)
        lam = jnp.float32(lambda_param)

        @pl.when(i == j)
        def _():
            # Extract diag(c) from the same accumulator used for frob so both
            # loss terms see identical values.
            rows = lax.broadcasted_iota(jnp.int32, c.shape, 0)
            cols = lax.broadcasted_iota(jnp.int32, c.shape, 1)
            dvec = jnp.sum(jnp.where(rows == cols, c, 0.0), axis=0, keepdims=True)
            inv = jnp.sum((dvec - 1.0) ** 2)
            dsq = jnp.sum(dvec * dvec)
            out_ref[0, 0] += -(inv + lam * (frob - dsq))

        @pl.when(i != j)
        def _():
            out_ref[0, 0] += -(lam * frob)


def _pick_n_block(n, cap, quantum=16):
    """Largest multiple of `quantum` <= cap that divides n, else n itself."""
    if n <= cap:
        return n
    b = (cap // quantum) * quantum
    while b >= quantum:
        if n % b == 0:
            return b
        b -= quantum
    return n


def barlow_loss(z_a, z_b, lambda_param: float = 0.005, eps: float = 1e-5, *,
                block_d: int = 512, block_n=None, norm_dtype=jnp.bfloat16):
    assert z_a.shape == z_b.shape and z_a.ndim == 2
    n, d = z_a.shape

    bd = min(block_d, d)
    assert d % bd == 0, "D must be divisible by block_d"
    assert bd == d or bd % 128 == 0, "block_d must be a multiple of 128 (or = D)"
    gd = d // bd

    # Batch tiling: pass 3 prefers the whole batch resident (k axis collapses).
    bn = min(block_n, n) if block_n is not None else _pick_n_block(n, 4096)
    assert n % bn == 0, "N must be divisible by block_n"
    gn = n // bn
    # Smaller batch tile for the streaming stats / normalize passes.
    bn12 = _pick_n_block(n, 1024)
    gn12 = n // bn12

    vmem_limit = 48 * 1024 * 1024   # fits v7x's 64 MiB physical VMEM

    # ---- Pass 1: shared batch-norm statistics over the combined 2N samples ----
    mean, istd = pl.pallas_call(
        functools.partial(_stats_kernel, n_batch=n, eps=eps),
        out_shape=(jax.ShapeDtypeStruct((1, d), jnp.float32),
                   jax.ShapeDtypeStruct((1, d), jnp.float32)),
        grid=(gd, gn12),
        in_specs=[pl.BlockSpec((bn12, bd), lambda jb, kb: (kb, jb)),
                  pl.BlockSpec((bn12, bd), lambda jb, kb: (kb, jb))],
        out_specs=(pl.BlockSpec((1, bd), lambda jb, kb: (0, jb)),
                   pl.BlockSpec((1, bd), lambda jb, kb: (0, jb))),
        compiler_params=pltpu.CompilerParams(
            dimension_semantics=("parallel", "arbitrary"),
            vmem_limit_bytes=vmem_limit),
    )(z_a, z_b)

    # ---- Pass 2: pre-normalized, pre-scaled bf16 operands written once ----
    za_n, zb_n = pl.pallas_call(
        _normalize_kernel,
        out_shape=(jax.ShapeDtypeStruct((n, d), norm_dtype),
                   jax.ShapeDtypeStruct((n, d), norm_dtype)),
        grid=(gn12, gd),
        in_specs=[pl.BlockSpec((bn12, bd), lambda ni, di: (ni, di)),
                  pl.BlockSpec((bn12, bd), lambda ni, di: (ni, di)),
                  pl.BlockSpec((1, bd), lambda ni, di: (0, di)),
                  pl.BlockSpec((1, bd), lambda ni, di: (0, di))],
        out_specs=(pl.BlockSpec((bn12, bd), lambda ni, di: (ni, di)),
                   pl.BlockSpec((bn12, bd), lambda ni, di: (ni, di))),
        compiler_params=pltpu.CompilerParams(
            dimension_semantics=("parallel", "parallel"),
            vmem_limit_bytes=vmem_limit),
    )(z_a, z_b, mean, istd)

    # ---- Pass 3: tiled cross-correlation + per-D_i loss partials ----
    # i is "parallel" (output blocks indexed only by i); with gn == 1 the z_a
    # i-panel's block index is constant across the j sweep, so it is DMA'd once.
    partials = pl.pallas_call(
        functools.partial(_corr_kernel, lambda_param=lambda_param),
        out_shape=jax.ShapeDtypeStruct((1, gd), jnp.float32),
        grid=(gd, gd, gn),
        in_specs=[pl.BlockSpec((bn, bd), lambda i, j, k: (k, i)),   # z_a[:, i-tile]
                  pl.BlockSpec((bn, bd), lambda i, j, k: (k, j))],  # z_b[:, j-tile]
        out_specs=pl.BlockSpec((1, 1), lambda i, j, k: (0, i),
                               memory_space=pltpu.SMEM),
        scratch_shapes=[pltpu.VMEM((bd, bd), jnp.float32)],
        compiler_params=pltpu.CompilerParams(
            dimension_semantics=("parallel", "arbitrary", "arbitrary"),
            vmem_limit_bytes=vmem_limit),
    )(za_n, zb_n)

    # TODO(synk): gather_distributed (torch.distributed all_reduce of c) has no
    # single-device Pallas equivalent; this implements the world_size == 1 path.
    return jnp.sum(partials)


def _barlow_loss_ref(z_a, z_b, lambda_param: float = 0.005, eps: float = 1e-5):
    # Pure-JAX reference mirroring the PyTorch forward (f32 throughout).
    combined = jnp.concatenate([z_a, z_b], axis=0).astype(jnp.float32)
    mean = jnp.mean(combined, axis=0)
    var = jnp.mean((combined - mean) ** 2, axis=0)
    inv_std = 1.0 / jnp.sqrt(var + eps)
    za_n = (z_a.astype(jnp.float32) - mean) * inv_std
    zb_n = (z_b.astype(jnp.float32) - mean) * inv_std
    n = z_a.shape[0]
    c = (za_n.T @ zb_n) / n
    inv = jnp.sum((jnp.diag(c) - 1.0) ** 2)
    red = jnp.sum(c ** 2) - jnp.sum(jnp.diag(c) ** 2)
    return -(inv + lambda_param * red)


if __name__ == "__main__":
    key = jax.random.PRNGKey(0)
    ka, kb = jax.random.split(key)
    N, D = 32, 256
    z_a = jax.random.normal(ka, (N, D), dtype=jnp.float32)
    z_b = jax.random.normal(kb, (N, D), dtype=jnp.float32)

    ref = _barlow_loss_ref(z_a, z_b)

    # (2, 2) feature grid with the batch axis collapsed (block_n = N):
    # exercises resident z_a panels, block-diagonal and off-diagonal c tiles.
    out = barlow_loss(z_a, z_b, block_d=128)
    out = jax.block_until_ready(out)
    assert jnp.allclose(out, ref, rtol=5e-3, atol=1e-2), (out, ref)

    # Also exercise the k (batch-reduction) axis of pass 3.
    out2 = barlow_loss(z_a, z_b, block_d=128, block_n=16)
    out2 = jax.block_until_ready(out2)
    assert jnp.allclose(out2, ref, rtol=5e-3, atol=1e-2), (out2, ref)

    print("KERNEL_OK")
</pallas_src>

<mosaic_0001>
module attributes {stable_mosaic.version = 11 : i64} {
  func.func @_stats_kernel(%arg0: i32, %arg1: i32, %arg2: memref<32x128xf32, #tpu.memory_space<vmem>>, %arg3: memref<32x128xf32, #tpu.memory_space<vmem>>, %arg4: memref<1x128xf32, #tpu.memory_space<vmem>>, %arg5: memref<1x128xf32, #tpu.memory_space<vmem>>) attributes {dimension_semantics = [#tpu.dimension_semantics<parallel>, #tpu.dimension_semantics<arbitrary>], iteration_bounds = array<i64: 2, 1>, scalar_prefetch = 0 : i64, scratch_operands = 0 : i64, tpu.core_type = #tpu.core_type<tc>, window_params = [{transform_indices = @transform_0, window_bounds = array<i64: 32, 128>}, {transform_indices = @transform_1, window_bounds = array<i64: 32, 128>}, {transform_indices = @transform_2, window_bounds = array<i64: 1, 128>}, {transform_indices = @transform_3, window_bounds = array<i64: 1, 128>}]} {
    %c0_i32 = arith.constant 0 : i32
    %0 = arith.cmpi eq, %arg1, %c0_i32 : i32
    %1 = arith.extui %0 : i1 to i32
    %c0_i32_0 = arith.constant 0 : i32
    %2 = arith.cmpi ne, %1, %c0_i32_0 : i32
    scf.if %2 {
      %cst_17 = arith.constant 0.000000e+00 : f32
      %26 = vector.broadcast %cst_17 : f32 to vector<1x128xf32>
      %c0_18 = arith.constant 0 : index
      %c0_19 = arith.constant 0 : index
      %27 = vector.load %arg4[%c0_18, %c0_19] : memref<1x128xf32, #tpu.memory_space<vmem>>, vector<1x128xf32>
      tpu.vector_store %arg4[%c0_18, %c0_19], %26 {strides = array<i32>} : memref<1x128xf32, #tpu.memory_space<vmem>>, vector<1x128xf32>,
      %cst_20 = arith.constant 0.000000e+00 : f32
      %28 = vector.broadcast %cst_20 : f32 to vector<1x128xf32>
      %c0_21 = arith.constant 0 : index
      %c0_22 = arith.constant 0 : index
      %29 = vector.load %arg5[%c0_21, %c0_22] : memref<1x128xf32, #tpu.memory_space<vmem>>, vector<1x128xf32>
      tpu.vector_store %arg5[%c0_21, %c0_22], %28 {strides = array<i32>} : memref<1x128xf32, #tpu.memory_space<vmem>>, vector<1x128xf32>,
    } else {
    }
    %c0 = arith.constant 0 : index
    %c0_1 = arith.constant 0 : index
    %3 = vector.load %arg2[%c0, %c0_1] : memref<32x128xf32, #tpu.memory_space<vmem>>, vector<32x128xf32>
    %c0_2 = arith.constant 0 : index
    %c0_3 = arith.constant 0 : index
    %4 = vector.load %arg3[%c0_2, %c0_3] : memref<32x128xf32, #tpu.memory_space<vmem>>, vector<32x128xf32>
    %c0_4 = arith.constant 0 : index
    %c0_5 = arith.constant 0 : index
    %5 = vector.load %arg4[%c0_4, %c0_5] : memref<1x128xf32, #tpu.memory_space<vmem>>, vector<1x128xf32>
    %cst = arith.constant dense<0.000000e+00> : vector<128xf32>
    %6 = vector.multi_reduction <add>, %3, %cst [0] : vector<32x128xf32> to vector<128xf32>
    %7 = vector.shape_cast %6 : vector<128xf32> to vector<1x128xf32>
    %cst_6 = arith.constant dense<0.000000e+00> : vector<128xf32>
    %8 = vector.multi_reduction <add>, %4, %cst_6 [0] : vector<32x128xf32> to vector<128xf32>
    %9 = vector.shape_cast %8 : vector<128xf32> to vector<1x128xf32>
    %10 = arith.addf %7, %9 : vector<1x128xf32>
    %11 = arith.addf %5, %10 : vector<1x128xf32>
    %c0_7 = arith.constant 0 : index
    %c0_8 = arith.constant 0 : index
    %12 = vector.load %arg4[%c0_7, %c0_8] : memref<1x128xf32, #tpu.memory_space<vmem>>, vector<1x128xf32>
    tpu.vector_store %arg4[%c0_7, %c0_8], %11 {strides = array<i32>} : memref<1x128xf32, #tpu.memory_space<vmem>>, vector<1x128xf32>,
    %c0_9 = arith.constant 0 : index
    %c0_10 = arith.constant 0 : index
    %13 = vector.load %arg5[%c0_9, %c0_10] : memref<1x128xf32, #tpu.memory_space<vmem>>, vector<1x128xf32>
    %14 = arith.mulf %3, %3 : vector<32x128xf32>
    %cst_11 = arith.constant dense<0.000000e+00> : vector<128xf32>
    %15 = vector.multi_reduction <add>, %14, %cst_11 [0] : vector<32x128xf32> to vector<128xf32>
    %16 = vector.shape_cast %15 : vector<128xf32> to vector<1x128xf32>
    %17 = arith.mulf %4, %4 : vector<32x128xf32>
    %cst_12 = arith.constant dense<0.000000e+00> : vector<128xf32>
    %18 = vector.multi_reduction <add>, %17, %cst_12 [0] : vector<32x128xf32> to vector<128xf32>
    %19 = vector.shape_cast %18 : vector<128xf32> to vector<1x128xf32>
    %20 = arith.addf %16, %19 : vector<1x128xf32>
    %21 = arith.addf %13, %20 : vector<1x128xf32>
    %c0_13 = arith.constant 0 : index
    %c0_14 = arith.constant 0 : index
    %22 = vector.load %arg5[%c0_13, %c0_14] : memref<1x128xf32, #tpu.memory_space<vmem>>, vector<1x128xf32>
    tpu.vector_store %arg5[%c0_13, %c0_14], %21 {strides = array<i32>} : memref<1x128xf32, #tpu.memory_space<vmem>>, vector<1x128xf32>,
    %c0_i32_15 = arith.constant 0 : i32
    %23 = arith.cmpi eq, %arg1, %c0_i32_15 : i32
    %24 = arith.extui %23 : i1 to i32
    %c0_i32_16 = arith.constant 0 : i32
    %25 = arith.cmpi ne, %24, %c0_i32_16 : i32
    scf.if %25 {
      %c0_17 = arith.constant 0 : index
      %c0_18 = arith.constant 0 : index
      %26 = vector.load %arg4[%c0_17, %c0_18] : memref<1x128xf32, #tpu.memory_space<vmem>>, vector<1x128xf32>
      %cst_19 = arith.constant 1.562500e-02 : f32
      %27 = vector.broadcast %cst_19 : f32 to vector<1x128xf32>
      %28 = arith.mulf %26, %27 : vector<1x128xf32>
      %c0_20 = arith.constant 0 : index
      %c0_21 = arith.constant 0 : index
      %29 = vector.load %arg5[%c0_20, %c0_21] : memref<1x128xf32, #tpu.memory_space<vmem>>, vector<1x128xf32>
      %cst_22 = arith.constant 1.562500e-02 : f32
      %30 = vector.broadcast %cst_22 : f32 to vector<1x128xf32>
      %31 = arith.mulf %29, %30 : vector<1x128xf32>
      %32 = arith.mulf %28, %28 : vector<1x128xf32>
      %33 = arith.subf %31, %32 : vector<1x128xf32>
      %cst_23 = arith.constant 0.000000e+00 : f32
      %34 = vector.broadcast %cst_23 : f32 to vector<1x128xf32>
      %35 = arith.maximumf %33, %34 : vector<1x128xf32>
      %c0_24 = arith.constant 0 : index
      %c0_25 = arith.constant 0 : index
      %36 = vector.load %arg4[%c0_24, %c0_25] : memref<1x128xf32, #tpu.memory_space<vmem>>, vector<1x128xf32>
      tpu.vector_store %arg4[%c0_24, %c0_25], %28 {strides = array<i32>} : memref<1x128xf32, #tpu.memory_space<vmem>>, vector<1x128xf32>,
      %cst_26 = arith.constant 9.99999974E-6 : f32
      %37 = vector.broadcast %cst_26 : f32 to vector<1x128xf32>
      %38 = arith.addf %35, %37 : vector<1x128xf32>
      %39 = math.rsqrt %38 : vector<1x128xf32>
      %cst_27 = arith.constant 0.176776692 : f32
      %40 = vector.broadcast %cst_27 : f32 to vector<1x128xf32>
      %41 = arith.mulf %39, %40 : vector<1x128xf32>
      %c0_28 = arith.constant 0 : index
      %c0_29 = arith.constant 0 : index
      %42 = vector.load %arg5[%c0_28, %c0_29] : memref<1x128xf32, #tpu.memory_space<vmem>>, vector<1x128xf32>
      tpu.vector_store %arg5[%c0_28, %c0_29], %41 {strides = array<i32>} : memref<1x128xf32, #tpu.memory_space<vmem>>, vector<1x128xf32>,
    } else {
    }
    return
  }
  func.func @transform_0(%arg0: i32, %arg1: i32) -> (i32, i32) {
    %c0_i32 = arith.constant 0 : i32
    return %arg1, %arg0 : i32, i32
  }
  func.func @transform_1(%arg0: i32, %arg1: i32) -> (i32, i32) {
    %c0_i32 = arith.constant 0 : i32
    return %arg1, %arg0 : i32, i32
  }
  func.func @transform_2(%arg0: i32, %arg1: i32) -> (i32, i32) {
    %c0_i32 = arith.constant 0 : i32
    %c0_i32_0 = arith.constant 0 : i32
    return %c0_i32, %arg0 : i32, i32
  }
  func.func @transform_3(%arg0: i32, %arg1: i32) -> (i32, i32) {
    %c0_i32 = arith.constant 0 : i32
    %c0_i32_0 = arith.constant 0 : i32
    return %c0_i32, %arg0 : i32, i32
  }
}

</mosaic_0001>

<llo_original>
// kernel: tpu_custom_call.1
$region0: #{tpu_custom_call.1}
  #allocation0 [shape = 'u32[]', space=smem, size = 0x4, offset = 0x4, fixed_abs, tag = 'smem constant byte address 0x4 - core index']
  #allocation1 [shape = 'u32[144,128]{1,0:T(1,128)}', space=vmem, size = 0x12000, scoped, tag = 'internal scratch']
  %s0 = inlined_call_operand.hbm [shape: f32[32,256], index: 0, kind: input, shape index: {}]
  %s1 = inlined_call_operand.hbm [shape: f32[32,256], index: 1, kind: input, shape index: {}]
  %s2 = inlined_call_operand.hbm [shape: f32[1,256], index: 2, kind: output, shape index: {0}]
  %s3 = inlined_call_operand.hbm [shape: f32[1,256], index: 3, kind: output, shape index: {1}]
  %4 = xla_tuple %s2, %s3
  %s5 = sld [smem:[#allocation0]]
  $region65: #{tpu_custom_call.1} parent=0
    _
  %s7 = ssub.s32 1, %s5
  %s8 = scalar_select 0, %s7, %s5
  $region1: #{tpu_custom_call.1} parent=0
    #allocation2 [shape = 'u8[32768]{0}', space=vmem, size = 0x8000, scoped, tag = 'input window, operand 0']
    #allocation3 [shape = 's32[2]{0}', space=sflag, size = 0x8, scoped, tag = 'scoped memory for tpu_custom_call.1']
    #allocation4 [shape = 's32[2]{0}', space=sflag, size = 0x8, scoped, tag = 'scoped memory for tpu_custom_call.1']
    #allocation5 [shape = 'u8[32768]{0}', space=vmem, size = 0x8000, scoped, tag = 'input window, operand 1']
    #allocation6 [shape = 's32[2]{0}', space=sflag, size = 0x8, scoped, tag = 'scoped memory for tpu_custom_call.1']
    #allocation7 [shape = 'u8[1024]{0}', space=vmem, size = 0x400, scoped, tag = 'output window, operand 0']
    #allocation8 [shape = 'u8[1024]{0}', space=vmem, size = 0x400, scoped, tag = 'output window, operand 1']
    #allocation9 [shape = 's32[2]{0}', space=sflag, size = 0x8, scoped, tag = 'scoped memory for tpu_custom_call.1']
    %9 = vsyncpa [#allocation3], 0
    %s10 = scalar_lea.sflag [#allocation3], 1
    %11 = vsyncpa %s10, 0
    %12 = vsyncpa [#allocation6], 0
    %s13 = scalar_lea.sflag [#allocation6], 1
    %14 = vsyncpa %s13, 0
    %15 = vsyncpa [#allocation4], 0
    %s16 = scalar_lea.sflag [#allocation4], 1
    %17 = vsyncpa %s16, 0
    %18 = vsyncpa [#allocation9], 0
    %s19 = scalar_lea.sflag [#allocation9], 1
    %20 = vsyncpa %s19, 0
    loop: start=0, step=1, limit=4
    $region2: #{tpu_custom_call.1} parent=1 // loop_pre_header
      _
    $region3: #{tpu_custom_call.1} parent=1 // loop_header
      %s22 = sphi 0, %s26
      %p23 = scmp.ge.s32.totalorder %s22, 4
      %s29 = sphi 0, %s41
      %s30 = sphi 0, %s37
      %s31 = sphi 0, %s29
      %s32 = sphi 0, %s30
      %s33 = sphi 0, %s31
      %s34 = sphi 0, %s32
      %s46 = sphi 0, %s48
      %s49 = sphi 0, %s46
      %s50 = sphi 0, %s49
      %s66 = sphi 0, %s50
      %s74 = sphi 0, %s76
      %s77 = sphi 0, %s74
      %s78 = sphi 0, %s77
      %s94 = sphi 0, %s78
      %s100 = sphi 0, %s102
      %s103 = sphi 0, %s100
      %s104 = sphi 0, %s103
      %s120 = sphi 0, %s104
      %s126 = sphi 0, %s128
      %s129 = sphi 0, %s126
      %s130 = sphi 0, %s129
      %s146 = sphi 0, %s130
    $region4: #{tpu_custom_call.1} parent=1 // loop_header_branch
      %25 = sbr.rel (%p23) target = $region8
    $region5: #{tpu_custom_call.1} parent=1 // loop_body
      %s27 = ssub.s32 %s22, 1
      %s28 = ssub.s32 %s22, 2
      %s35 = sadd.s32 1, %s30
      %p36 = scmp.ge.s32.totalorder %s35, 1
      %s37 = scalar_select %p36, 0, %s35
      %s38 = sadd.s32 1, %s29
      %s39 = scalar_select %p36, %s38, %s29
      %p40 = scmp.ge.s32.totalorder %s39, 2
      %s41 = scalar_select %p40, 0, %s39
      %s42 = ssub.s32 %s30, %s37
      %s43 = ssub.s32 %s29, %s41
      %s44 = sor.u32 %s42, %s43
      %p45 = scmp.eq.s32.totalorder %s44, 0
      %s47 = sadd.s32 %s46, 1
      %s48 = scalar_select %p45, %s46, %s47
      %p51 = pneg %p45
      %p52 = scmp.eq.s32.totalorder %s22, 1
      %p53 = por %p51, %p52
      %p54 = scmp.ne.s32.totalorder %s46, %s49
      %p55 = scmp.eq.s32.totalorder %s22, 0
      %p56 = por %p54, %p55
      %p57 = scmp.ne.s32.totalorder %s46, %s49
      %p58 = scmp.eq.s32.totalorder %s27, 1
      %p59 = por %p57, %p58
      %p60 = scmp.ne.s32.totalorder %s49, %s50
      %p61 = scmp.eq.s32.totalorder %s27, 0
      %p62 = por %p60, %p61
      %p63 = scmp.ne.s32.totalorder %s49, %s50
      %p64 = scmp.eq.s32.totalorder %s28, 1
      %p65 = por %p63, %p64
      %p67 = scmp.ne.s32.totalorder %s50, %s66
      %p68 = scmp.eq.s32.totalorder %s28, 0
      %p69 = por %p67, %p68
      %s70 = ssub.s32 %s30, %s37
      %s71 = ssub.s32 %s29, %s41
      %s72 = sor.u32 %s70, %s71
      %p73 = scmp.eq.s32.totalorder %s72, 0
      %s75 = sadd.s32 %s74, 1
      %s76 = scalar_select %p73, %s74, %s75
      %p79 = pneg %p73
      %p80 = scmp.eq.s32.totalorder %s22, 1
      %p81 = por %p79, %p80
      %p82 = scmp.ne.s32.totalorder %s74, %s77
      %p83 = scmp.eq.s32.totalorder %s22, 0
      %p84 = por %p82, %p83
      %p85 = scmp.ne.s32.totalorder %s74, %s77
      %p86 = scmp.eq.s32.totalorder %s27, 1
      %p87 = por %p85, %p86
      %p88 = scmp.ne.s32.totalorder %s77, %s78
      %p89 = scmp.eq.s32.totalorder %s27, 0
      %p90 = por %p88, %p89
      %p91 = scmp.ne.s32.totalorder %s77, %s78
      %p92 = scmp.eq.s32.totalorder %s28, 1
      %p93 = por %p91, %p92
      %p95 = scmp.ne.s32.totalorder %s78, %s94
      %p96 = scmp.eq.s32.totalorder %s28, 0
      %p97 = por %p95, %p96
      %s98 = ssub.s32 %s29, %s41
      %p99 = scmp.eq.s32.totalorder %s98, 0
      %s101 = sadd.s32 %s100, 1
      %s102 = scalar_select %p99, %s100, %s101
      %p105 = pneg %p99
      %p106 = scmp.eq.s32.totalorder %s22, 1
      %p107 = por %p105, %p106
      %p108 = scmp.ne.s32.totalorder %s100, %s103
      %p109 = scmp.eq.s32.totalorder %s22, 0
      %p110 = por %p108, %p109
      %p111 = scmp.ne.s32.totalorder %s100, %s103
      %p112 = scmp.eq.s32.totalorder %s27, 1
      %p113 = por %p111, %p112
      %p114 = scmp.ne.s32.totalorder %s103, %s104
      %p115 = scmp.eq.s32.totalorder %s27, 0
      %p116 = por %p114, %p115
      %p117 = scmp.ne.s32.totalorder %s103, %s104
      %p118 = scmp.eq.s32.totalorder %s28, 1
      %p119 = por %p117, %p118
      %p121 = scmp.ne.s32.totalorder %s104, %s120
      %p122 = scmp.eq.s32.totalorder %s28, 0
      %p123 = por %p121, %p122
      %s124 = ssub.s32 %s29, %s41
      %p125 = scmp.eq.s32.totalorder %s124, 0
      %s127 = sadd.s32 %s126, 1
      %s128 = scalar_select %p125, %s126, %s127
      %p131 = pneg %p125
      %p132 = scmp.eq.s32.totalorder %s22, 1
      %p133 = por %p131, %p132
      %p134 = scmp.ne.s32.totalorder %s126, %s129
      %p135 = scmp.eq.s32.totalorder %s22, 0
      %p136 = por %p134, %p135
      %p137 = scmp.ne.s32.totalorder %s126, %s129
      %p138 = scmp.eq.s32.totalorder %s27, 1
      %p139 = por %p137, %p138
      %p140 = scmp.ne.s32.totalorder %s129, %s130
      %p141 = scmp.eq.s32.totalorder %s27, 0
      %p142 = por %p140, %p141
      %p143 = scmp.ne.s32.totalorder %s129, %s130
      %p144 = scmp.eq.s32.totalorder %s28, 1
      %p145 = por %p143, %p144
      %p147 = scmp.ne.s32.totalorder %s130, %s146
      %p148 = scmp.eq.s32.totalorder %s28, 0
      %p149 = por %p147, %p148
      %p150 = scmp.le.s32.totalorder 1, %s22
      %p151 = scmp.lt.s32.totalorder %s22, 3
      %p152 = pnand %p150, %p151
      %p153 = pneg %p152
      // Predicated region
      $region9: #{tpu_custom_call.1} parent=5 // pred_check
        _
      $region10: #{tpu_custom_call.1} parent=5 // pred_check_branch
        %155 = sbr.rel (%p152) target = $region12
      $region11: #{tpu_custom_call.1} parent=5 // pred_region
        %s156 = ssub.s32 %s22, 1
      $region12: #{tpu_custom_call.1} parent=5 // pred_fallthru
        _
      %p157 = scmp.lt.s32.totalorder %s22, 2
      // Predicated region
      $region13: #{tpu_custom_call.1} parent=5 // pred_check
        %p158 = pneg %p157
      $region14: #{tpu_custom_call.1} parent=5 // pred_check_branch
        %160 = sbr.rel (%p158) target = $region16
      $region15: #{tpu_custom_call.1} parent=5 // pred_region
        // Predicated region
        $region17: #{tpu_custom_call.1} parent=15 // pred_check
          %p161 = pneg %p56
        $region18: #{tpu_custom_call.1} parent=15 // pred_check_branch
          %163 = sbr.rel (%p161) target = $region20
        $region19: #{tpu_custom_call.1} parent=15 // pred_region
          %s164 = sand.u32 %s46, 1
          %s165 = scalar_lea.sflag [#allocation3], %s164
          %s166 = sand.u32 %s46, 1
          %s167 = smul.addr %s166, 32
          %s168 = scalar_lea.vmem [#allocation2], %s167
          %s169 = smul.u32 4, %s30
          %s171 = ssub.s32 512, 512
          %172 = vsyncadd %s165, %s171
          %s173 = smul.addr %s169, 2
          %s174 = sadd.s32 %s29, %s173
          %s175 = smul.addr %s174, 128
          %s176 = scalar_lea.hbm %s0, %s175
          %s177 = sshll.u32 %s168, 4
          %s178 = int_to_ptr.vmem [resolvable:$true] %s177
          %183 = dma.hbm_to_vmem [thread:$0]  %s176, 512, %s178, %s165, 256, 128, 8
        $region20: #{tpu_custom_call.1} parent=15 // pred_fallthru
          _
        // Predicated region
        $region21: #{tpu_custom_call.1} parent=15 // pred_check
          %p184 = pneg %p84
        $region22: #{tpu_custom_call.1} parent=15 // pred_check_branch
          %186 = sbr.rel (%p184) target = $region24
        $region23: #{tpu_custom_call.1} parent=15 // pred_region
          %s187 = sand.u32 %s74, 1
          %s188 = scalar_lea.sflag [#allocation6], %s187
          %s189 = sand.u32 %s74, 1
          %s190 = smul.addr %s189, 32
          %s191 = scalar_lea.vmem [#allocation5], %s190
          %s192 = smul.u32 4, %s30
          %s194 = ssub.s32 512, 512
          %195 = vsyncadd %s188, %s194
          %s196 = smul.addr %s192, 2
          %s197 = sadd.s32 %s29, %s196
          %s198 = smul.addr %s197, 128
          %s199 = scalar_lea.hbm %s1, %s198
          %s200 = sshll.u32 %s191, 4
          %s201 = int_to_ptr.vmem [resolvable:$true] %s200
          %206 = dma.hbm_to_vmem [thread:$0]  %s199, 512, %s201, %s188, 256, 128, 8
        $region24: #{tpu_custom_call.1} parent=15 // pred_fallthru
          _
      $region16: #{tpu_custom_call.1} parent=5 // pred_fallthru
        _
      %p207 = scmp.le.s32.totalorder 1, %s22
      %p208 = scmp.lt.s32.totalorder %s22, 3
      %p209 = pnand %p207, %p208
      %p210 = pneg %p209
      // Predicated region
      $region25: #{tpu_custom_call.1} parent=5 // pred_check
        _
      $region26: #{tpu_custom_call.1} parent=5 // pred_check_branch
        %212 = sbr.rel (%p209) target = $region28
      $region27: #{tpu_custom_call.1} parent=5 // pred_region
        %s213 = ssub.s32 %s22, 1
        %s214 = sand.u32 %s49, 1
        %s215 = scalar_lea.sflag [#allocation3], %s214
        %s216 = sand.u32 %s49, 1
        %s217 = smul.addr %s216, 32
        %s218 = scalar_lea.vmem [#allocation2], %s217
        // Predicated region
        $region29: #{tpu_custom_call.1} parent=27 // pred_check
          %p219 = pneg %p62
        $region30: #{tpu_custom_call.1} parent=27 // pred_check_branch
          %221 = sbr.rel (%p219) target = $region32
        $region31: #{tpu_custom_call.1} parent=27 // pred_region
          %222 = dma.done %s215, 512
        $region32: #{tpu_custom_call.1} parent=27 // pred_fallthru
          _
        %s223 = sand.u32 %s77, 1
        %s224 = scalar_lea.sflag [#allocation6], %s223
        %s225 = sand.u32 %s77, 1
        %s226 = smul.addr %s225, 32
        %s227 = scalar_lea.vmem [#allocation5], %s226
        // Predicated region
        $region33: #{tpu_custom_call.1} parent=27 // pred_check
          %p228 = pneg %p90
        $region34: #{tpu_custom_call.1} parent=27 // pred_check_branch
          %230 = sbr.rel (%p228) target = $region36
        $region35: #{tpu_custom_call.1} parent=27 // pred_region
          %231 = dma.done %s224, 512
        $region36: #{tpu_custom_call.1} parent=27 // pred_fallthru
          _
        %s232 = sand.u32 %s49, 1
        %s233 = scalar_lea.sflag [#allocation3], %s232
        %s234 = sand.u32 %s49, 1
        %s235 = smul.addr %s234, 32
        %s236 = scalar_lea.vmem [#allocation2], %s235
        %p237 = pneg %p62
        %p238 = pneg %p59
        %s239 = sand.u32 %s77, 1
        %s240 = scalar_lea.sflag [#allocation6], %s239
        %s241 = sand.u32 %s77, 1
        %s242 = smul.addr %s241, 32
        %s243 = scalar_lea.vmem [#allocation5], %s242
        %p244 = pneg %p90
        %p245 = pneg %p87
        %p246 = pneg %p116
        %p247 = pneg %p113
        %s248 = sand.u32 %s103, 1
        %s249 = scalar_lea.sflag [#allocation4], %s248
        %s250 = sand.u32 %s103, 1
        %s251 = scalar_lea.vmem [#allocation7], %s250
        %p252 = pneg %p142
        %p253 = pneg %p139
        %s254 = sand.u32 %s129, 1
        %s255 = scalar_lea.sflag [#allocation9], %s254
        %s256 = sand.u32 %s129, 1
        %s257 = scalar_lea.vmem [#allocation8], %s256
        %s258 = smul.u32 4, %s32
        %s259 = smul.u32 4, %s32
        %p260 = scmp.eq.s32.totalorder %s32, 0
        // Predicated region
        $region37: #{tpu_custom_call.1} parent=27 // pred_check
          %p261 = pneg %p260
        $region38: #{tpu_custom_call.1} parent=27 // pred_check_branch
          %263 = sbr.rel (%p261) target = $region40
        $region39: #{tpu_custom_call.1} parent=27 // pred_region
          %264 = vst [vmem:[%s251] sm:$0x1] 0.0
          %265 = vst [vmem:[%s257] sm:$0x1] 0.0
        $region40: #{tpu_custom_call.1} parent=27 // pred_fallthru
          _
        %v266 = vld [vmem:[%s218] sm:$0xff]
        %v267 = vld [vmem:[%s218 + $0x8] sm:$0xff]
        %v268 = vld [vmem:[%s218 + $0x10] sm:$0xff]
        %v269 = vld [vmem:[%s218 + $0x18] sm:$0xff]
        %v270 = vld [vmem:[%s227] sm:$0xff]
        %v271 = vld [vmem:[%s227 + $0x8] sm:$0xff]
        %v272 = vld [vmem:[%s227 + $0x10] sm:$0xff]
        %v273 = vld [vmem:[%s227 + $0x18] sm:$0xff]
        %v274 = vld [vmem:[%s251] sm:$0x1]
        %v275 = vadd.f32 %v266, %v267
        %v276 = vadd.f32 %v275, %v268
        %v277 = vadd.f32 %v276, %v269
        %v278 = vrot.slane %v277, 4
        %v279 = vadd.f32 %v277, %v278
        %v280 = vrot.slane %v279, 2
        %v281 = vadd.f32 %v279, %v280
        %v282 = vrot.slane %v281, 1
        %v283 = vadd.f32 %v281, %v282
        %v284 = vadd.f32 %v270, %v271
        %v285 = vadd.f32 %v284, %v272
        %v286 = vadd.f32 %v285, %v273
        %v287 = vrot.slane %v286, 4
        %v288 = vadd.f32 %v286, %v287
        %v289 = vrot.slane %v288, 2
        %v290 = vadd.f32 %v288, %v289
        %v291 = vrot.slane %v290, 1
        %v292 = vadd.f32 %v290, %v291
        %v293 = vadd.f32 %v283, %v292
        %v294 = vadd.f32 %v274, %v293
        %295 = vst [vmem:[%s251] sm:$0x1] %v294
        %v296 = vld [vmem:[%s257] sm:$0x1]
        %v297 = vmul.f32 %v266, %v266
        %v298 = vmul.f32 %v267, %v267
        %v299 = vmul.f32 %v268, %v268
        %v300 = vmul.f32 %v269, %v269
        %v301 = vadd.f32 %v297, %v298
        %v302 = vadd.f32 %v301, %v299
        %v303 = vadd.f32 %v302, %v300
        %v304 = vrot.slane %v303, 4
        %v305 = vadd.f32 %v303, %v304
        %v306 = vrot.slane %v305, 2
        %v307 = vadd.f32 %v305, %v306
        %v308 = vrot.slane %v307, 1
        %v309 = vadd.f32 %v307, %v308
        %v310 = vmul.f32 %v270, %v270
        %v311 = vmul.f32 %v271, %v271
        %v312 = vmul.f32 %v272, %v272
        %v313 = vmul.f32 %v273, %v273
        %v314 = vadd.f32 %v310, %v311
        %v315 = vadd.f32 %v314, %v312
        %v316 = vadd.f32 %v315, %v313
        %v317 = vrot.slane %v316, 4
        %v318 = vadd.f32 %v316, %v317
        %v319 = vrot.slane %v318, 2
        %v320 = vadd.f32 %v318, %v319
        %v321 = vrot.slane %v320, 1
        %v322 = vadd.f32 %v320, %v321
        %v323 = vadd.f32 %v309, %v322
        %v324 = vadd.f32 %v296, %v323
        %325 = vst [vmem:[%s257] sm:$0x1] %v324
        // Predicated region
        $region41: #{tpu_custom_call.1} parent=27 // pred_check
          %p326 = pneg %p260
        $region42: #{tpu_custom_call.1} parent=27 // pred_check_branch
          %328 = sbr.rel (%p326) target = $region44
        $region43: #{tpu_custom_call.1} parent=27 // pred_region
          %v329 = vld [vmem:[%s251] sm:$0x1]
          %v330 = vmul.f32 %v329, 0.015625
          %v331 = vld [vmem:[%s257] sm:$0x1]
          %v332 = vmul.f32 %v331, 0.015625
          %v333 = vmul.f32 %v330, %v330
          %v334 = vsub.f32 %v332, %v333
          %v335 = vmax.f32 %v334, 0.0
          %336 = vst [vmem:[%s251] sm:$0x1] %v330
          %v337 = vadd.f32 %v335, 1e-05
          %v338 = vrsqrt.pop %v337
          %v339 = vmul.f32 %v338, 0.17677669
          %340 = vst [vmem:[%s257] sm:$0x1] %v339
        $region44: #{tpu_custom_call.1} parent=27 // pred_fallthru
          _
        %s341 = sand.u32 %s103, 1
        %s342 = scalar_lea.sflag [#allocation4], %s341
        %s343 = sand.u32 %s103, 1
        %s344 = scalar_lea.vmem [#allocation7], %s343
        %s345 = sand.u32 %s129, 1
        %s346 = scalar_lea.sflag [#allocation9], %s345
        %s347 = sand.u32 %s129, 1
        %s348 = scalar_lea.vmem [#allocation8], %s347
        // Predicated region
        $region45: #{tpu_custom_call.1} parent=27 // pred_check
          %p349 = pneg %p113
        $region46: #{tpu_custom_call.1} parent=27 // pred_check_branch
          %351 = sbr.rel (%p349) target = $region48
        $region47: #{tpu_custom_call.1} parent=27 // pred_region
          %s353 = ssub.s32 16, 16
          %354 = vsyncadd %s342, %s353
          %s355 = smul.addr %s31, 16
          %s356 = scalar_lea.hbm %s2, %s355
          %s358 = sshll.u32 %s344, 4
          %s359 = int_to_ptr.vmem [resolvable:$true] %s358
          %361 = dma.vmem_to_hbm [thread:$0]  %s359, 16, %s356, %s342
        $region48: #{tpu_custom_call.1} parent=27 // pred_fallthru
          _
        // Predicated region
        $region49: #{tpu_custom_call.1} parent=27 // pred_check
          %p362 = pneg %p139
        $region50: #{tpu_custom_call.1} parent=27 // pred_check_branch
          %364 = sbr.rel (%p362) target = $region52
        $region51: #{tpu_custom_call.1} parent=27 // pred_region
          %s366 = ssub.s32 16, 16
          %367 = vsyncadd %s346, %s366
          %s368 = smul.addr %s31, 16
          %s369 = scalar_lea.hbm %s3, %s368
          %s371 = sshll.u32 %s348, 4
          %s372 = int_to_ptr.vmem [resolvable:$true] %s371
          %374 = dma.vmem_to_hbm [thread:$0]  %s372, 16, %s369, %s346
        $region52: #{tpu_custom_call.1} parent=27 // pred_fallthru
          _
      $region28: #{tpu_custom_call.1} parent=5 // pred_fallthru
        _
      %p375 = scmp.le.s32.totalorder 2, %s22
      // Predicated region
      $region53: #{tpu_custom_call.1} parent=5 // pred_check
        %p376 = pneg %p375
      $region54: #{tpu_custom_call.1} parent=5 // pred_check_branch
        %378 = sbr.rel (%p376) target = $region56
      $region55: #{tpu_custom_call.1} parent=5 // pred_region
        %s379 = ssub.s32 %s22, 2
        // Predicated region
        $region57: #{tpu_custom_call.1} parent=55 // pred_check
          %p380 = pneg %p119
        $region58: #{tpu_custom_call.1} parent=55 // pred_check_branch
          %382 = sbr.rel (%p380) target = $region60
        $region59: #{tpu_custom_call.1} parent=55 // pred_region
          %s383 = sand.u32 %s104, 1
          %s384 = scalar_lea.sflag [#allocation4], %s383
          %s385 = sand.u32 %s104, 1
          %s386 = scalar_lea.vmem [#allocation7], %s385
          %387 = dma.done %s384, 16
        $region60: #{tpu_custom_call.1} parent=55 // pred_fallthru
          _
        // Predicated region
        $region61: #{tpu_custom_call.1} parent=55 // pred_check
          %p388 = pneg %p145
        $region62: #{tpu_custom_call.1} parent=55 // pred_check_branch
          %390 = sbr.rel (%p388) target = $region64
        $region63: #{tpu_custom_call.1} parent=55 // pred_region
          %s391 = sand.u32 %s130, 1
          %s392 = scalar_lea.sflag [#allocation9], %s391
          %s393 = sand.u32 %s130, 1
          %s394 = scalar_lea.vmem [#allocation8], %s393
          %395 = dma.done %s392, 16
        $region64: #{tpu_custom_call.1} parent=55 // pred_fallthru
          _
      $region56: #{tpu_custom_call.1} parent=5 // pred_fallthru
        _
    $region6: #{tpu_custom_call.1} parent=1 // loop_footer
      %s26 = sadd.s32 1, %s22
    $region7: #{tpu_custom_call.1} parent=1 // loop_footer_branch
      %21 = sbr.rel target = $region3
    $region8: #{tpu_custom_call.1} parent=1 // loop_exit
      _
    %396 = vsyncpa [#allocation3], 1
    %s397 = scalar_lea.sflag [#allocation3], 1
    %398 = vsyncpa %s397, 1
    %399 = vsyncpa [#allocation6], 1
    %s400 = scalar_lea.sflag [#allocation6], 1
    %401 = vsyncpa %s400, 1
    %402 = vsyncpa [#allocation4], 1
    %s403 = scalar_lea.sflag [#allocation4], 1
    %404 = vsyncpa %s403, 1
    %405 = vsyncpa [#allocation9], 1
    %s406 = scalar_lea.sflag [#allocation9], 1
    %407 = vsyncpa %s406, 1

</llo_original>
